<compile_context>
chip_gen: v5e
topology: v5e:2x2
jax: 0.10.0
libtpu: 0.0.40
codegen_flags: <defaults>
</compile_context>

<pallas_src>
import functools

import jax
import jax.numpy as jnp
from jax.experimental import pallas as pl
from jax.experimental.pallas import tpu as pltpu


def _round_up(x, m):
    return (x + m - 1) // m * m


# ---------------------------------------------------------------------------
# Kernel
# ---------------------------------------------------------------------------
def svpg_particle_kernel(x_ref, w_ref, b_ref, out_ref, *, in_p, h, out_size):
    """Fused actor+critic forward.

    x_ref:   [B, in_p]                  (in_p = in_size rounded up to 8, zero padded)
    w_ref:   [in_p + 4h, 2h]            weight slab (layer1 | layer2 | head)
    b_ref:   [3, 2h]                    bias slab   (row per layer)
    out_ref: [B, out_size + 1]          [mean | value]
    """
    H2 = 2 * h
    x = x_ref[...]

    w1 = w_ref[0:in_p, :]                       # [in_p, 2h]  (actor | critic layer 1)
    w2 = w_ref[in_p:in_p + H2, :]               # [2h, 2h]    block-diag layer 2
    w3 = w_ref[in_p + H2:in_p + 2 * H2, :]      # [2h, 2h]    block-diag head (zero-padded cols)

    h1 = jnp.tanh(
        jnp.dot(x, w1, preferred_element_type=jnp.float32) + b_ref[0:1, :]
    )                                            # [B, 2h] = [a1 | c1]
    h2 = jnp.tanh(
        jnp.dot(h1, w2, preferred_element_type=jnp.float32) + b_ref[1:2, :]
    )                                            # [B, 2h] = [a2 | c2]
    head = (
        jnp.dot(h2, w3, preferred_element_type=jnp.float32) + b_ref[2:3, :]
    )                                            # [B, 2h]; cols 0:out = mean, col out = value

    out_ref[...] = head[:, : out_size + 1]       # single fused store: [mean | value]


# ---------------------------------------------------------------------------
# Host-side parameter packing (done once, outside the forward hot path)
# ---------------------------------------------------------------------------
def pack_params(p, in_size, h, out_size):
    """Pack the 13 small parameter arrays into one weight slab + one bias slab."""
    in_p = _round_up(in_size, 8)
    H2 = 2 * h

    W = jnp.zeros((in_p + 2 * H2, H2), jnp.float32)
    # layer 1: [a_w1 | c_w1]
    W = W.at[0:in_size, 0:h].set(p["a_w1"])
    W = W.at[0:in_size, h:H2].set(p["c_w1"])
    # layer 2: block-diag(a_w2, c_w2)
    W = W.at[in_p:in_p + h, 0:h].set(p["a_w2"])
    W = W.at[in_p + h:in_p + H2, h:H2].set(p["c_w2"])
    # head: block-diag(m_w [h,out], c_w3 [h,1]), zero-padded to width 2h
    W = W.at[in_p + H2:in_p + H2 + h, 0:out_size].set(p["m_w"])
    W = W.at[in_p + H2 + h:in_p + 2 * H2, out_size:out_size + 1].set(p["c_w3"])

    B = jnp.zeros((3, H2), jnp.float32)
    B = B.at[0, 0:h].set(p["a_b1"][0])
    B = B.at[0, h:H2].set(p["c_b1"][0])
    B = B.at[1, 0:h].set(p["a_b2"][0])
    B = B.at[1, h:H2].set(p["c_b2"][0])
    B = B.at[2, 0:out_size].set(p["m_b"][0])
    B = B.at[2, out_size:out_size + 1].set(p["c_b3"][0])

    return {
        "W": W,
        "b": B,
        "logstd": p["logstd"],
        "in_size": in_size,
        "in_p": in_p,
        "h": h,
        "out_size": out_size,
    }


# ---------------------------------------------------------------------------
# Forward wrapper
# ---------------------------------------------------------------------------
def svpg_particle_forward(x, packed):
    Bsz, in_size = x.shape
    in_p = packed["in_p"]
    h = packed["h"]
    out_size = packed["out_size"]
    H2 = 2 * h

    if in_p != in_size:
        x = jnp.pad(x, ((0, 0), (0, in_p - in_size)))

    vmem = pl.BlockSpec(memory_space=pltpu.MemorySpace.VMEM)

    cost = pl.CostEstimate(
        flops=2 * Bsz * (in_p * H2 + H2 * H2 + H2 * H2),
        transcendentals=2 * Bsz * H2,  # tanh on the two fused hidden layers
        bytes_accessed=4 * (Bsz * in_p + packed["W"].size + packed["b"].size
                            + Bsz * (out_size + 1)),
    )

    fused = pl.pallas_call(
        functools.partial(svpg_particle_kernel, in_p=in_p, h=h, out_size=out_size),
        out_shape=jax.ShapeDtypeStruct((Bsz, out_size + 1), jnp.float32),
        in_specs=[vmem, vmem, vmem],
        out_specs=vmem,
        cost_estimate=cost,
    )(x, packed["W"], packed["b"])

    mean = fused[:, :out_size]
    value = fused[:, out_size:out_size + 1]
    # std = exp(logstd) is independent of x -> computed outside the kernel.
    std = jnp.broadcast_to(jnp.exp(packed["logstd"]), mean.shape)
    return mean, std, value


# ---------------------------------------------------------------------------
# Synthetic init + pure-JAX reference (unfused math) for correctness checking
# ---------------------------------------------------------------------------
def init_params(key, in_size, out_size, h):
    """Weights stored as [fan_in, fan_out] (orthogonal_init in the spec is a no-op)."""
    ks = jax.random.split(key, 6)
    s = 0.1
    return {
        "a_w1": s * jax.random.normal(ks[0], (in_size, h), jnp.float32),
        "a_b1": jnp.zeros((1, h), jnp.float32),
        "a_w2": s * jax.random.normal(ks[1], (h, h), jnp.float32),
        "a_b2": jnp.zeros((1, h), jnp.float32),
        "m_w": s * jax.random.normal(ks[2], (h, out_size), jnp.float32),
        "m_b": jnp.zeros((1, out_size), jnp.float32),
        "logstd": jnp.zeros((1, out_size), jnp.float32),  # AddBias init = zeros
        "c_w1": s * jax.random.normal(ks[3], (in_size, h), jnp.float32),
        "c_b1": jnp.zeros((1, h), jnp.float32),
        "c_w2": s * jax.random.normal(ks[4], (h, h), jnp.float32),
        "c_b2": jnp.zeros((1, h), jnp.float32),
        "c_w3": s * jax.random.normal(ks[5], (h, 1), jnp.float32),
        "c_b3": jnp.zeros((1, 1), jnp.float32),
    }


def reference_forward(x, p):
    a1 = jnp.tanh(x @ p["a_w1"] + p["a_b1"])
    a2 = jnp.tanh(a1 @ p["a_w2"] + p["a_b2"])
    mean = a2 @ p["m_w"] + p["m_b"]
    std = jnp.exp(jnp.broadcast_to(p["logstd"], mean.shape))
    c1 = jnp.tanh(x @ p["c_w1"] + p["c_b1"])
    c2 = jnp.tanh(c1 @ p["c_w2"] + p["c_b2"])
    value = c2 @ p["c_w3"] + p["c_b3"]
    return mean, std, value


if __name__ == "__main__":
    B, in_size, out_size, h = 8, 16, 4, 32

    key = jax.random.PRNGKey(0)
    k_x, k_p = jax.random.split(key)
    x = jax.random.normal(k_x, (B, in_size), jnp.float32)
    raw_params = init_params(k_p, in_size, out_size, h)
    packed = pack_params(raw_params, in_size, h, out_size)

    mean, std, value = svpg_particle_forward(x, packed)
    jax.block_until_ready((mean, std, value))

    r_mean, r_std, r_value = reference_forward(x, raw_params)
    assert mean.shape == (B, out_size) and std.shape == (B, out_size)
    assert value.shape == (B, 1)
    assert jnp.allclose(mean, r_mean, atol=1e-5), "mean mismatch"
    assert jnp.allclose(std, r_std, atol=1e-5), "std mismatch"
    assert jnp.allclose(value, r_value, atol=1e-5), "value mismatch"

    print("KERNEL_OK")
</pallas_src>

<mosaic_0001>
module attributes {stable_mosaic.version = 11 : i64} {
  func.func @svpg_particle_kernel(%arg0: memref<8x16xf32, #tpu.memory_space<vmem>>, %arg1: memref<144x64xf32, #tpu.memory_space<vmem>>, %arg2: memref<3x64xf32, #tpu.memory_space<vmem>>, %arg3: memref<8x5xf32, #tpu.memory_space<vmem>>) attributes {dimension_semantics = [], scalar_prefetch = 0 : i64, scratch_operands = 0 : i64, tpu.core_type = #tpu.core_type<tc>} {
    %c0 = arith.constant 0 : index
    %c0_0 = arith.constant 0 : index
    %0 = vector.load %arg0[%c0, %c0_0] : memref<8x16xf32, #tpu.memory_space<vmem>>, vector<8x16xf32>
    %c0_1 = arith.constant 0 : index
    %c0_2 = arith.constant 0 : index
    %1 = vector.load %arg1[%c0_1, %c0_2] : memref<144x64xf32, #tpu.memory_space<vmem>>, vector<16x64xf32>
    %c16 = arith.constant 16 : index
    %c0_3 = arith.constant 0 : index
    %2 = vector.load %arg1[%c16, %c0_3] : memref<144x64xf32, #tpu.memory_space<vmem>>, vector<64x64xf32>
    %c80 = arith.constant 80 : index
    %c0_4 = arith.constant 0 : index
    %3 = vector.load %arg1[%c80, %c0_4] : memref<144x64xf32, #tpu.memory_space<vmem>>, vector<64x64xf32>
    %cst = arith.constant dense<0.000000e+00> : vector<8x64xf32>
    %4 = tpu.matmul %0, %1, %cst {dimension_numbers = #tpu.dot_dimension_numbers<[1], [0], [0], [1], [0, 0, 1, 1], [], []>} : vector<8x16xf32>, vector<16x64xf32>, vector<8x64xf32> -> vector<8x64xf32>
    %c0_5 = arith.constant 0 : index
    %c0_6 = arith.constant 0 : index
    %5 = vector.load %arg2[%c0_5, %c0_6] : memref<3x64xf32, #tpu.memory_space<vmem>>, vector<1x64xf32>
    %6 = vector.broadcast %5 : vector<1x64xf32> to vector<8x64xf32>
    %7 = arith.addf %4, %6 : vector<8x64xf32>
    %8 = math.tanh %7 : vector<8x64xf32>
    %cst_7 = arith.constant dense<0.000000e+00> : vector<8x64xf32>
    %9 = tpu.matmul %8, %2, %cst_7 {dimension_numbers = #tpu.dot_dimension_numbers<[1], [0], [0], [1], [0, 0, 1, 1], [], []>} : vector<8x64xf32>, vector<64x64xf32>, vector<8x64xf32> -> vector<8x64xf32>
    %c1 = arith.constant 1 : index
    %c0_8 = arith.constant 0 : index
    %10 = vector.load %arg2[%c1, %c0_8] : memref<3x64xf32, #tpu.memory_space<vmem>>, vector<1x64xf32>
    %11 = vector.broadcast %10 : vector<1x64xf32> to vector<8x64xf32>
    %12 = arith.addf %9, %11 : vector<8x64xf32>
    %13 = math.tanh %12 : vector<8x64xf32>
    %cst_9 = arith.constant dense<0.000000e+00> : vector<8x64xf32>
    %14 = tpu.matmul %13, %3, %cst_9 {dimension_numbers = #tpu.dot_dimension_numbers<[1], [0], [0], [1], [0, 0, 1, 1], [], []>} : vector<8x64xf32>, vector<64x64xf32>, vector<8x64xf32> -> vector<8x64xf32>
    %c2 = arith.constant 2 : index
    %c0_10 = arith.constant 0 : index
    %15 = vector.load %arg2[%c2, %c0_10] : memref<3x64xf32, #tpu.memory_space<vmem>>, vector<1x64xf32>
    %16 = vector.broadcast %15 : vector<1x64xf32> to vector<8x64xf32>
    %17 = arith.addf %14, %16 : vector<8x64xf32>
    %18 = vector.extract_strided_slice %17 {offsets = [0, 0], sizes = [8, 5], strides = [1, 1]} : vector<8x64xf32> to vector<8x5xf32>
    %c0_11 = arith.constant 0 : index
    %c0_12 = arith.constant 0 : index
    %19 = vector.load %arg3[%c0_11, %c0_12] : memref<8x5xf32, #tpu.memory_space<vmem>>, vector<8x5xf32>
    tpu.vector_store %arg3[%c0_11, %c0_12], %18 {strides = array<i32>} : memref<8x5xf32, #tpu.memory_space<vmem>>, vector<8x5xf32>,
    return
  }
}

</mosaic_0001>

<llo_original>
// kernel: tpu_custom_call.1
$region0: #{tpu_custom_call.1}
  #allocation0 [shape = 'u32[]', space=smem, size = 0x4, offset = 0x4, fixed_abs, tag = 'smem constant byte address 0x4 - core index']
  #allocation1 [shape = 'u32[72,128]{1,0:T(1,128)}', space=vmem, size = 0x9000, scoped, tag = 'internal scratch']
  %s0 = inlined_call_operand.vmem [shape: f32[8,16], index: 0, kind: input, shape index: {}]
  %s1 = inlined_call_operand.vmem [shape: f32[144,64], index: 1, kind: input, shape index: {}]
  %s2 = inlined_call_operand.vmem [shape: f32[3,64], index: 2, kind: input, shape index: {}]
  %s3 = inlined_call_operand.hbm [shape: f32[8,5], index: 3, kind: output, shape index: {}]
  %s4 = sld [smem:[#allocation0]]
  $region22: #{tpu_custom_call.1} parent=0
    _
  %s6 = ssub.s32 1, %s4
  %s7 = scalar_select 0, %s6, %s4
  $region1: #{tpu_custom_call.1} parent=0
    #allocation2 [shape = 'u8[4096]{0}', space=vmem, size = 0x1000, scoped, tag = 'output window, operand 0, single buffered']
    #allocation3 [shape = 's32[1]{0}', space=sflag, size = 0x4, scoped, tag = 'scoped memory for tpu_custom_call.1']
    %8 = vsyncpa [#allocation3], 0
    // Predicated region
    $region2: #{tpu_custom_call.1} parent=1 // pred_check
      _
    $region3: #{tpu_custom_call.1} parent=1 // pred_check_branch
      %10 = sbr.rel (0) target = $region5
    $region4: #{tpu_custom_call.1} parent=1 // pred_region
      _
    $region5: #{tpu_custom_call.1} parent=1 // pred_fallthru
      _
    // Predicated region
    $region6: #{tpu_custom_call.1} parent=1 // pred_check
      _
    $region7: #{tpu_custom_call.1} parent=1 // pred_check_branch
      %12 = sbr.rel (0) target = $region9
    $region8: #{tpu_custom_call.1} parent=1 // pred_region
      _
    $region9: #{tpu_custom_call.1} parent=1 // pred_fallthru
      _
    // Predicated region
    $region10: #{tpu_custom_call.1} parent=1 // pred_check
      _
    $region11: #{tpu_custom_call.1} parent=1 // pred_check_branch
      %14 = sbr.rel (0) target = $region13
    $region12: #{tpu_custom_call.1} parent=1 // pred_region
      _
    $region13: #{tpu_custom_call.1} parent=1 // pred_fallthru
      _
    %v15 = vld [vmem:[%s0] sm:$0xff]
    %v16 = vld [vmem:[%s1] sm:$0xff]
    %v17 = vld [vmem:[%s1 + $0x8] sm:$0xff]
    %v18 = vld [vmem:[%s1 + $0x10] sm:$0xff]
    %v19 = vld [vmem:[%s1 + $0x18] sm:$0xff]
    %v20 = vld [vmem:[%s1 + $0x20] sm:$0xff]
    %v21 = vld [vmem:[%s1 + $0x28] sm:$0xff]
    %v22 = vld [vmem:[%s1 + $0x30] sm:$0xff]
    %v23 = vld [vmem:[%s1 + $0x38] sm:$0xff]
    %v24 = vld [vmem:[%s1 + $0x40] sm:$0xff]
    %v25 = vld [vmem:[%s1 + $0x48] sm:$0xff]
    %v26 = vld [vmem:[%s1 + $0x50] sm:$0xff]
    %v27 = vld [vmem:[%s1 + $0x58] sm:$0xff]
    %v28 = vld [vmem:[%s1 + $0x60] sm:$0xff]
    %v29 = vld [vmem:[%s1 + $0x68] sm:$0xff]
    %v30 = vld [vmem:[%s1 + $0x70] sm:$0xff]
    %v31 = vld [vmem:[%s1 + $0x78] sm:$0xff]
    %v32 = vld [vmem:[%s1 + $0x80] sm:$0xff]
    %v33 = vld [vmem:[%s1 + $0x88] sm:$0xff]
    %v34 = vld [vmem:[%s2] sm:$0x1]
    %v35 = vperm.slane %v34, 0
    %vm36 = vcmask 130048
    %v38 = vsel %vm36, %v15, 0
    %40 = vmatpush.msra.mxu0 0.0
    %41 = vmatpush.msra.mxu0 0.0
    %42 = vmatpush.msra.mxu0 0.0
    %43 = vmatpush.msra.mxu0 0.0
    %44 = vmatpush.msra.mxu0 0.0
    %45 = vmatpush.msra.mxu0 0.0
    %46 = vmatpush.msra.mxu0 0.0
    %47 = vmatpush.msra.mxu0 0.0
    %48 = vmatpush.msra.mxu0 0.0
    %49 = vmatpush.msra.mxu0 0.0
    %50 = vmatpush.msra.mxu0 0.0
    %51 = vmatpush.msra.mxu0 0.0
    %52 = vmatpush.msra.mxu0 0.0
    %53 = vmatpush.msra.mxu0 0.0
    %54 = vmatpush.msra.mxu0 %v17
    %55 = vmatpush.msra.mxu0 %v16
    %56 = vmatmul.f32.gmra.mxu0 %v38
    %v57 = vpop.f32.mrf.mxu0
    %v58 = vadd.f32 %v35, %v57
    %59 = vdwg.mxu0
    %v60 = vtanh.pop %v58
    %v61 = vld [vmem:[%s2 + $0x1] sm:$0x1]
    %v62 = vperm.slane %v61, 0
    %vm63 = vcmask 523264
    %v65 = vsel %vm63, %v60, 0
    %67 = vmatpush.msra.mxu0 0.0
    %68 = vmatpush.msra.mxu0 0.0
    %69 = vmatpush.msra.mxu0 0.0
    %70 = vmatpush.msra.mxu0 0.0
    %71 = vmatpush.msra.mxu0 0.0
    %72 = vmatpush.msra.mxu0 0.0
    %73 = vmatpush.msra.mxu0 0.0
    %74 = vmatpush.msra.mxu0 0.0
    %75 = vmatpush.msra.mxu0 %v25
    %76 = vmatpush.msra.mxu0 %v24
    %77 = vmatpush.msra.mxu0 %v23
    %78 = vmatpush.msra.mxu0 %v22
    %79 = vmatpush.msra.mxu0 %v21
    %80 = vmatpush.msra.mxu0 %v20
    %81 = vmatpush.msra.mxu0 %v19
    %82 = vmatpush.msra.mxu0 %v18
    %83 = vmatmul.f32.gmra.mxu0 %v65
    %v84 = vpop.f32.mrf.mxu0
    %v85 = vadd.f32 %v62, %v84
    %86 = vdwg.mxu0
    %v87 = vtanh.pop %v85
    %v88 = vld [vmem:[%s2 + $0x2] sm:$0x1]
    %v89 = vperm.slane %v88, 0
    %v91 = vsel %vm63, %v87, 0
    %93 = vmatpush.msra.mxu0 0.0
    %94 = vmatpush.msra.mxu0 0.0
    %95 = vmatpush.msra.mxu0 0.0
    %96 = vmatpush.msra.mxu0 0.0
    %97 = vmatpush.msra.mxu0 0.0
    %98 = vmatpush.msra.mxu0 0.0
    %99 = vmatpush.msra.mxu0 0.0
    %100 = vmatpush.msra.mxu0 0.0
    %101 = vmatpush.msra.mxu0 %v33
    %102 = vmatpush.msra.mxu0 %v32
    %103 = vmatpush.msra.mxu0 %v31
    %104 = vmatpush.msra.mxu0 %v30
    %105 = vmatpush.msra.mxu0 %v29
    %106 = vmatpush.msra.mxu0 %v28
    %107 = vmatpush.msra.mxu0 %v27
    %108 = vmatpush.msra.mxu0 %v26
    %109 = vmatmul.f32.gmra.mxu0 %v91
    %v110 = vpop.f32.mrf.mxu0
    %v111 = vadd.f32 %v89, %v110
    %112 = vdwg.mxu0
    %vm113 = vcmask 39936
    %114 = vst.msk [vmem:[#allocation2] sm:$0xff] %vm113, %v111
    // Predicated region
    $region14: #{tpu_custom_call.1} parent=1 // pred_check
      _
    $region15: #{tpu_custom_call.1} parent=1 // pred_check_branch
      %116 = sbr.rel (0) target = $region17
    $region16: #{tpu_custom_call.1} parent=1 // pred_region
      %118 = vsyncadd [#allocation3], 0
      %s120 = sshll.u32 [#allocation2], 4
      %s121 = int_to_ptr.vmem [resolvable:$true] %s120
      %s122 = sshll.u32 %s3, 4
      %s123 = int_to_ptr.hbm [resolvable:$true] %s122
      %125 = dma.vmem_to_hbm [thread:$0]  %s121, 128, %s123, [#allocation3]
    $region17: #{tpu_custom_call.1} parent=1 // pred_fallthru
      _
    // Predicated region
    $region18: #{tpu_custom_call.1} parent=1 // pred_check
      _
    $region19: #{tpu_custom_call.1} parent=1 // pred_check_branch
      %127 = sbr.rel (0) target = $region21
    $region20: #{tpu_custom_call.1} parent=1 // pred_region
      %129 = dma.done [#allocation3], 128
    $region21: #{tpu_custom_call.1} parent=1 // pred_fallthru
      _
    %130 = vsyncpa [#allocation3], 1

</llo_original>
